<compile_context>
chip_gen: v5e
topology: v5e:2x2
jax: 0.10.0
libtpu: 0.0.40
codegen_flags: <defaults>
</compile_context>

<pallas_src>
import functools

import jax
import jax.numpy as jnp
from jax.experimental import pallas as pl
from jax.experimental.pallas import tpu as pltpu

LN_EPS = 1e-5


def _row_tile(m_rows, cap=512):
    """Largest row tile <= cap that divides m_rows and is 8-row aligned (or full)."""
    for t in range(min(cap, m_rows), 0, -1):
        if m_rows % t == 0 and (t % 8 == 0 or t == m_rows):
            return t
    return m_rows


# ----------------------------------------------------------------------------
# Kernel 1: LayerNorm + QKV projection over (b*n, dim) row tiles
# ----------------------------------------------------------------------------
def ln_qkv_kernel(x_ref, g_ref, b_ref, w_ref, o_ref):
    x = x_ref[...]                                       # (tm, dim) f32
    mean = jnp.mean(x, axis=-1, keepdims=True)
    xc = x - mean
    var = jnp.mean(xc * xc, axis=-1, keepdims=True)      # biased var (PyTorch LN)
    y = xc * jax.lax.rsqrt(var + LN_EPS) * g_ref[...] + b_ref[...]
    # kept f32 on purpose: q/k feed the Moore-Penrose pinv (conditioning-sensitive)
    o_ref[...] = jnp.dot(y, w_ref[...], preferred_element_type=jnp.float32)


# ----------------------------------------------------------------------------
# Kernel 2: Nystrom attention core.  Grid over batch, heads merged on lanes.
# ----------------------------------------------------------------------------
def nystrom_kernel(q_ref, k_ref, v_ref, ql_ref, kl_ref, wexp_ref, invd_ref, o_ref,
                   *, heads, iters, scale, K):
    n_pad, inner = q_ref.shape[1], q_ref.shape[2]
    m = ql_ref.shape[1]
    dh = inner // heads
    bf = jnp.bfloat16

    q2 = q_ref[0] * scale                                # (n_pad, inner) f32
    k2 = k_ref[0]
    v2 = v_ref[0]
    q_l = ql_ref[0]                                      # (m, inner), scale folded in
    k_l = kl_ref[0]
    inv_d = invd_ref[...]                                # (1, 1) global pinv denom^-1

    eye = (jax.lax.broadcasted_iota(jnp.int32, (m, m), 0) ==
           jax.lax.broadcasted_iota(jnp.int32, (m, m), 1)).astype(jnp.float32)

    def softmax(s, approx):
        s = s - jnp.max(s, axis=-1, keepdims=True)
        e = jnp.exp(s)
        r = jnp.sum(e, axis=-1, keepdims=True)
        if approx:
            return e * pl.reciprocal(r, approx=True)     # EUP slot, frees the VALU
        return e / r

    # per-head attention (static unrolled loop; lane slices of the merged layout)
    head_outs = []
    for h in range(heads):
        sl = slice(h * dh, (h + 1) * dh)
        q_h, k_h, v_h = q2[:, sl], k2[:, sl], v2[:, sl]
        ql_h, kl_h = q_l[:, sl], k_l[:, sl]

        sim1 = jnp.dot(q_h.astype(bf), kl_h.astype(bf).T,
                       preferred_element_type=jnp.float32)            # (n_pad, m)
        sim2 = jnp.dot(ql_h, kl_h.T, preferred_element_type=jnp.float32)  # (m, m)
        sim3 = jnp.dot(ql_h.astype(bf), k_h.astype(bf).T,
                       preferred_element_type=jnp.float32)            # (m, n_pad)

        attn1 = softmax(sim1, approx=True)
        attn2 = softmax(sim2, approx=False)     # feeds the pinv: exact f32
        attn3 = softmax(sim3, approx=True)

        # Moore-Penrose iterative pseudo-inverse (f32, GLOBAL denominator passed in)
        z = attn2.T * inv_d
        for _ in range(iters):
            xz = jnp.dot(attn2, z, preferred_element_type=jnp.float32)
            t = 7.0 * eye - xz
            t = 15.0 * eye - jnp.dot(xz, t, preferred_element_type=jnp.float32)
            t = 13.0 * eye - jnp.dot(xz, t, preferred_element_type=jnp.float32)
            z = 0.25 * jnp.dot(z, t, preferred_element_type=jnp.float32)

        d3 = jnp.dot(attn3.astype(bf), v_h.astype(bf),
                     preferred_element_type=jnp.float32)               # (m, dh)
        d2 = jnp.dot(z, d3, preferred_element_type=jnp.float32)        # (m, dh)
        out_h = jnp.dot(attn1.astype(bf), d2.astype(bf),
                        preferred_element_type=jnp.float32)            # (n_pad, dh)
        head_outs.append(out_h)

    out2 = jnp.concatenate(head_outs, axis=-1)                         # (n_pad, inner)

    # depthwise residual conv on v: K shifted copies (no dense n_pad x n_pad matmul)
    cpad = K // 2
    zp = jnp.zeros((cpad, inner), jnp.float32)
    vp = jnp.concatenate([zp, v2, zp], axis=0)                         # (n_pad+2c, inner)
    wexp = wexp_ref[...]                                               # (K, inner)
    conv = jnp.zeros((n_pad, inner), jnp.float32)
    for kk in range(K):
        conv = conv + vp[kk:kk + n_pad, :] * wexp[kk:kk + 1, :]

    o_ref[0] = (out2 + conv).astype(o_ref.dtype)


# ----------------------------------------------------------------------------
# Kernel 3: output projection + bias + residual over (b*n, dim) row tiles
# ----------------------------------------------------------------------------
def out_proj_kernel(a_ref, w_ref, bias_ref, x_ref, o_ref):
    y = jnp.dot(a_ref[...], w_ref[...], preferred_element_type=jnp.float32)
    o_ref[...] = y + bias_ref[...] + x_ref[...]


# ----------------------------------------------------------------------------
# Wrapper
# ----------------------------------------------------------------------------
def trans_layer_forward(x, params):
    b, n, dim = x.shape
    heads = params['heads']
    dh = params['dim_head']
    inner = heads * dh
    m = params['num_landmarks']
    iters = params['pinv_iterations']
    K = params['res_conv_kernel']
    scale = dh ** -0.5

    M = b * n
    tm = _row_tile(M)
    x2 = x.reshape(M, dim)

    # ---- Kernel 1: LayerNorm + QKV projection, batch folded into the M axis ----
    qkv = pl.pallas_call(
        ln_qkv_kernel,
        out_shape=jax.ShapeDtypeStruct((M, 3 * inner), jnp.float32),
        grid=(M // tm,),
        in_specs=[
            pl.BlockSpec((tm, dim), lambda i: (i, 0)),
            pl.BlockSpec((1, dim), lambda i: (0, 0)),
            pl.BlockSpec((1, dim), lambda i: (0, 0)),
            pl.BlockSpec((dim, 3 * inner), lambda i: (0, 0)),
        ],
        out_specs=pl.BlockSpec((tm, 3 * inner), lambda i: (i, 0)),
        compiler_params=pltpu.CompilerParams(dimension_semantics=("parallel",)),
    )(x2, params['ln_gamma'].reshape(1, dim), params['ln_beta'].reshape(1, dim),
      params['w_qkv'])

    # front-pad the sequence so it divides into num_landmarks groups.  Equivalent to
    # the reference's F.pad of the normalized input, since to_qkv has no bias.
    pad = (m - n % m) % m
    n_pad = n + pad
    l = n_pad // m

    qkv = jnp.pad(qkv.reshape(b, n, 3 * inner), ((0, 0), (pad, 0), (0, 0)))
    q, k, v = jnp.split(qkv, 3, axis=-1)          # each (b, n_pad, inner), heads merged

    # landmark means (reshape+mean, no pooling matmul) — shared between the GLOBAL
    # Moore-Penrose init denominator (must be global over batch*heads) and kernel 2.
    q_l = q.reshape(b, m, l, inner).sum(axis=2) * (scale / l)
    k_l = k.reshape(b, m, l, inner).sum(axis=2) * (1.0 / l)
    ql4 = q_l.reshape(b, m, heads, dh)
    kl4 = k_l.reshape(b, m, heads, dh)
    sim2 = jnp.einsum('bihd,bjhd->bhij', ql4, kl4, preferred_element_type=jnp.float32)
    attn2 = jax.nn.softmax(sim2, axis=-1)
    abs2 = jnp.abs(attn2)
    denom = jnp.max(jnp.sum(abs2, axis=-1)) * jnp.max(jnp.sum(abs2, axis=-2))
    inv_denom = (1.0 / denom).reshape(1, 1).astype(jnp.float32)

    # per-lane expanded depthwise-conv taps: w_exp[k, h*dh + j] = w_conv[h, k]
    w_exp = jnp.repeat(params['w_conv'].T, dh, axis=1)                 # (K, inner)

    # ---- Kernel 2: Nystrom core, grid over batch, heads merged on lanes ----
    attn_out = pl.pallas_call(
        functools.partial(nystrom_kernel, heads=heads, iters=iters,
                          scale=scale, K=K),
        out_shape=jax.ShapeDtypeStruct((b, n_pad, inner), jnp.bfloat16),
        grid=(b,),
        in_specs=[
            pl.BlockSpec((1, n_pad, inner), lambda i: (i, 0, 0)),
            pl.BlockSpec((1, n_pad, inner), lambda i: (i, 0, 0)),
            pl.BlockSpec((1, n_pad, inner), lambda i: (i, 0, 0)),
            pl.BlockSpec((1, m, inner), lambda i: (i, 0, 0)),
            pl.BlockSpec((1, m, inner), lambda i: (i, 0, 0)),
            pl.BlockSpec((K, inner), lambda i: (0, 0)),
            pl.BlockSpec((1, 1), lambda i: (0, 0)),
        ],
        out_specs=pl.BlockSpec((1, n_pad, inner), lambda i: (i, 0, 0)),
        compiler_params=pltpu.CompilerParams(
            dimension_semantics=("parallel",),
            vmem_limit_bytes=64 * 1024 * 1024),          # v7x-safe budget
    )(q, k, v, q_l, k_l, w_exp, inv_denom)

    # drop the front padding; heads are already merged on lanes (no transpose)
    ao = attn_out[:, n_pad - n:, :].reshape(M, inner)

    # ---- Kernel 3: to_out projection + bias + residual (output aliases x buffer) ----
    # TODO(synk): nn.Dropout(0.1) inside to_out is treated as eval-mode identity.
    out = pl.pallas_call(
        out_proj_kernel,
        out_shape=jax.ShapeDtypeStruct((M, dim), jnp.float32),
        grid=(M // tm,),
        in_specs=[
            pl.BlockSpec((tm, inner), lambda i: (i, 0)),
            pl.BlockSpec((inner, dim), lambda i: (0, 0)),
            pl.BlockSpec((1, dim), lambda i: (0, 0)),
            pl.BlockSpec((tm, dim), lambda i: (i, 0)),
        ],
        out_specs=pl.BlockSpec((tm, dim), lambda i: (i, 0)),
        input_output_aliases={3: 0},
        compiler_params=pltpu.CompilerParams(dimension_semantics=("parallel",)),
    )(ao, params['w_out'].astype(jnp.bfloat16), params['b_out'].reshape(1, dim), x2)

    return out.reshape(b, n, dim)


# ----------------------------------------------------------------------------
# Pure-JAX reference (same precision policy as the kernels: bf16 on the MXU for
# the attention matmuls and the output projection, f32 elsewhere).
# ----------------------------------------------------------------------------
def reference_forward(x, params):
    b, n, dim = x.shape
    heads = params['heads']
    dh = params['dim_head']
    inner = heads * dh
    m = params['num_landmarks']
    iters = params['pinv_iterations']
    K = params['res_conv_kernel']
    scale = dh ** -0.5
    bf = jnp.bfloat16

    mean = jnp.mean(x, axis=-1, keepdims=True)
    xc = x - mean
    var = jnp.mean(xc * xc, axis=-1, keepdims=True)
    y = xc * jax.lax.rsqrt(var + LN_EPS) * params['ln_gamma'] + params['ln_beta']
    qkv = jnp.dot(y.reshape(b * n, dim), params['w_qkv'],
                  preferred_element_type=jnp.float32).reshape(b, n, 3 * inner)

    pad = (m - n % m) % m
    n_pad = n + pad
    l = n_pad // m
    qkv = jnp.pad(qkv, ((0, 0), (pad, 0), (0, 0)))
    q, k, v = jnp.split(qkv, 3, axis=-1)

    def heads_split(t):
        return t.reshape(b, n_pad, heads, dh).transpose(0, 2, 1, 3)

    q, k, v = map(heads_split, (q, k, v))                 # (b, h, n_pad, dh)
    q = q * scale
    q_l = q.reshape(b, heads, m, l, dh).sum(axis=3) / l
    k_l = k.reshape(b, heads, m, l, dh).sum(axis=3) / l

    def mm_bf(a, c):
        return jnp.einsum('...id,...jd->...ij', a.astype(bf), c.astype(bf),
                          preferred_element_type=jnp.float32)

    sim1 = mm_bf(q, k_l)
    sim2 = jnp.einsum('...id,...jd->...ij', q_l, k_l,
                      preferred_element_type=jnp.float32)
    sim3 = mm_bf(q_l, k)
    attn1 = jax.nn.softmax(sim1, axis=-1)
    attn2 = jax.nn.softmax(sim2, axis=-1)
    attn3 = jax.nn.softmax(sim3, axis=-1)

    abs2 = jnp.abs(attn2)
    denom = jnp.max(jnp.sum(abs2, axis=-1)) * jnp.max(jnp.sum(abs2, axis=-2))
    z = jnp.swapaxes(attn2, -1, -2) / denom
    eye = jnp.eye(m, dtype=jnp.float32)
    for _ in range(iters):
        xz = attn2 @ z
        z = 0.25 * z @ (13.0 * eye - xz @ (15.0 * eye - xz @ (7.0 * eye - xz)))

    d3 = jnp.einsum('...ij,...jd->...id', attn3.astype(bf), v.astype(bf),
                    preferred_element_type=jnp.float32)
    d2 = jnp.einsum('...ij,...jd->...id', z, d3, preferred_element_type=jnp.float32)
    out = jnp.einsum('...ij,...jd->...id', attn1.astype(bf), d2.astype(bf),
                     preferred_element_type=jnp.float32)

    # depthwise residual conv on v (per head, K taps, 'same' zero padding)
    cpad = K // 2
    vp = jnp.pad(v, ((0, 0), (0, 0), (cpad, cpad), (0, 0)))
    w_conv = params['w_conv']
    conv = jnp.zeros_like(v)
    for kk in range(K):
        conv = conv + w_conv[:, kk][None, :, None, None] * vp[:, :, kk:kk + n_pad, :]
    out = out + conv

    out = out.transpose(0, 2, 1, 3).reshape(b, n_pad, inner)[:, n_pad - n:, :]
    proj = jnp.dot(out.reshape(b * n, inner).astype(bf),
                   params['w_out'].astype(bf),
                   preferred_element_type=jnp.float32).reshape(b, n, dim)
    return x + proj + params['b_out']


def init_params(key, dim, heads, res_conv_kernel=33):
    dim_head = dim // 8
    inner = heads * dim_head
    ks = jax.random.split(key, 6)
    return {
        'heads': heads,
        'dim_head': dim_head,
        'num_landmarks': dim // 2,
        'pinv_iterations': 6,
        'res_conv_kernel': res_conv_kernel,
        'ln_gamma': 1.0 + 0.1 * jax.random.normal(ks[0], (dim,), jnp.float32),
        'ln_beta': 0.1 * jax.random.normal(ks[1], (dim,), jnp.float32),
        'w_qkv': jax.random.normal(ks[2], (dim, 3 * inner), jnp.float32) * (dim ** -0.5),
        'w_out': jax.random.normal(ks[3], (inner, dim), jnp.float32) * (inner ** -0.5),
        'b_out': 0.02 * jax.random.normal(ks[4], (dim,), jnp.float32),
        'w_conv': jax.random.normal(ks[5], (heads, res_conv_kernel), jnp.float32)
                  * (res_conv_kernel ** -0.5),
    }


if __name__ == "__main__":
    key = jax.random.PRNGKey(0)
    k_p, k_x = jax.random.split(key)

    b, n, dim, heads = 4, 48, 64, 8        # n % num_landmarks != 0 -> exercises padding
    params = init_params(k_p, dim, heads)
    x = jax.random.normal(k_x, (b, n, dim), jnp.float32)

    ref = reference_forward(x, params)     # pure-JAX, precision-matched reference
    y = trans_layer_forward(x, params)
    jax.block_until_ready(y)

    assert y.shape == (b, n, dim)
    assert bool(jnp.all(jnp.isfinite(y)))
    err = float(jnp.max(jnp.abs(y - ref)))
    tol = 1e-1 * (1.0 + float(jnp.max(jnp.abs(ref))))
    assert err < tol, f"max abs err {err} exceeds tol {tol}"
    print("KERNEL_OK")
</pallas_src>

<mosaic_0001>
module attributes {stable_mosaic.version = 11 : i64} {
  func.func @ln_qkv_kernel(%arg0: i32, %arg1: memref<192x64xf32, #tpu.memory_space<vmem>>, %arg2: memref<1x64xf32, #tpu.memory_space<vmem>>, %arg3: memref<1x64xf32, #tpu.memory_space<vmem>>, %arg4: memref<64x192xf32, #tpu.memory_space<vmem>>, %arg5: memref<192x192xf32, #tpu.memory_space<vmem>>) attributes {dimension_semantics = [#tpu.dimension_semantics<parallel>], iteration_bounds = array<i64: 1>, scalar_prefetch = 0 : i64, scratch_operands = 0 : i64, tpu.core_type = #tpu.core_type<tc>, window_params = [{transform_indices = @transform_0, window_bounds = array<i64: 192, 64>}, {pipeline_mode = #tpu.pipeline_mode<synchronous>, transform_indices = @transform_1, window_bounds = array<i64: 1, 64>}, {pipeline_mode = #tpu.pipeline_mode<synchronous>, transform_indices = @transform_2, window_bounds = array<i64: 1, 64>}, {pipeline_mode = #tpu.pipeline_mode<synchronous>, transform_indices = @transform_3, window_bounds = array<i64: 64, 192>}, {transform_indices = @transform_4, window_bounds = array<i64: 192, 192>}]} {
    %c0 = arith.constant 0 : index
    %c0_0 = arith.constant 0 : index
    %0 = vector.load %arg1[%c0, %c0_0] : memref<192x64xf32, #tpu.memory_space<vmem>>, vector<192x64xf32>
    %cst = arith.constant dense<0.000000e+00> : vector<192xf32>
    %1 = vector.multi_reduction <add>, %0, %cst [1] : vector<192x64xf32> to vector<192xf32>
    %2 = vector.shape_cast %1 : vector<192xf32> to vector<192x1xf32>
    %cst_1 = arith.constant 6.400000e+01 : f32
    %3 = vector.broadcast %cst_1 : f32 to vector<192x1xf32>
    %4 = arith.divf %2, %3 : vector<192x1xf32>
    %5 = vector.broadcast %4 : vector<192x1xf32> to vector<192x64xf32>
    %6 = arith.subf %0, %5 : vector<192x64xf32>
    %7 = arith.mulf %6, %6 : vector<192x64xf32>
    %cst_2 = arith.constant dense<0.000000e+00> : vector<192xf32>
    %8 = vector.multi_reduction <add>, %7, %cst_2 [1] : vector<192x64xf32> to vector<192xf32>
    %9 = vector.shape_cast %8 : vector<192xf32> to vector<192x1xf32>
    %cst_3 = arith.constant 6.400000e+01 : f32
    %10 = vector.broadcast %cst_3 : f32 to vector<192x1xf32>
    %11 = arith.divf %9, %10 : vector<192x1xf32>
    %cst_4 = arith.constant 9.99999974E-6 : f32
    %12 = vector.broadcast %cst_4 : f32 to vector<192x1xf32>
    %13 = arith.addf %11, %12 : vector<192x1xf32>
    %14 = math.rsqrt %13 : vector<192x1xf32>
    %15 = vector.broadcast %14 : vector<192x1xf32> to vector<192x64xf32>
    %16 = arith.mulf %6, %15 : vector<192x64xf32>
    %c0_5 = arith.constant 0 : index
    %c0_6 = arith.constant 0 : index
    %17 = vector.load %arg2[%c0_5, %c0_6] : memref<1x64xf32, #tpu.memory_space<vmem>>, vector<1x64xf32>
    %18 = vector.broadcast %17 : vector<1x64xf32> to vector<192x64xf32>
    %19 = arith.mulf %16, %18 : vector<192x64xf32>
    %c0_7 = arith.constant 0 : index
    %c0_8 = arith.constant 0 : index
    %20 = vector.load %arg3[%c0_7, %c0_8] : memref<1x64xf32, #tpu.memory_space<vmem>>, vector<1x64xf32>
    %21 = vector.broadcast %20 : vector<1x64xf32> to vector<192x64xf32>
    %22 = arith.addf %19, %21 : vector<192x64xf32>
    %c0_9 = arith.constant 0 : index
    %c0_10 = arith.constant 0 : index
    %23 = vector.load %arg4[%c0_9, %c0_10] : memref<64x192xf32, #tpu.memory_space<vmem>>, vector<64x192xf32>
    %cst_11 = arith.constant dense<0.000000e+00> : vector<192x192xf32>
    %24 = tpu.matmul %22, %23, %cst_11 {dimension_numbers = #tpu.dot_dimension_numbers<[1], [0], [0], [1], [0, 0, 1, 1], [], []>} : vector<192x64xf32>, vector<64x192xf32>, vector<192x192xf32> -> vector<192x192xf32>
    %c0_12 = arith.constant 0 : index
    %c0_13 = arith.constant 0 : index
    %25 = vector.load %arg5[%c0_12, %c0_13] : memref<192x192xf32, #tpu.memory_space<vmem>>, vector<192x192xf32>
    tpu.vector_store %arg5[%c0_12, %c0_13], %24 {strides = array<i32>} : memref<192x192xf32, #tpu.memory_space<vmem>>, vector<192x192xf32>,
    return
  }
  func.func @transform_0(%arg0: i32) -> (i32, i32) {
    %c0_i32 = arith.constant 0 : i32
    %c0_i32_0 = arith.constant 0 : i32
    return %arg0, %c0_i32 : i32, i32
  }
  func.func @transform_1(%arg0: i32) -> (i32, i32) {
    %c0_i32 = arith.constant 0 : i32
    %c0_i32_0 = arith.constant 0 : i32
    %c0_i32_1 = arith.constant 0 : i32
    return %c0_i32, %c0_i32_0 : i32, i32
  }
  func.func @transform_2(%arg0: i32) -> (i32, i32) {
    %c0_i32 = arith.constant 0 : i32
    %c0_i32_0 = arith.constant 0 : i32
    %c0_i32_1 = arith.constant 0 : i32
    return %c0_i32, %c0_i32_0 : i32, i32
  }
  func.func @transform_3(%arg0: i32) -> (i32, i32) {
    %c0_i32 = arith.constant 0 : i32
    %c0_i32_0 = arith.constant 0 : i32
    %c0_i32_1 = arith.constant 0 : i32
    return %c0_i32, %c0_i32_0 : i32, i32
  }
  func.func @transform_4(%arg0: i32) -> (i32, i32) {
    %c0_i32 = arith.constant 0 : i32
    %c0_i32_0 = arith.constant 0 : i32
    return %arg0, %c0_i32 : i32, i32
  }
}

</mosaic_0001>

<llo_original>
// kernel: tpu_custom_call.1
$region0: #{tpu_custom_call.1}
  #allocation0 [shape = 'u32[]', space=smem, size = 0x4, offset = 0x4, fixed_abs, tag = 'smem constant byte address 0x4 - core index']
  #allocation1 [shape = 'u32[72,128]{1,0:T(1,128)}', space=vmem, size = 0x9000, scoped, tag = 'internal scratch']
  %s0 = inlined_call_operand.vmem [shape: f32[192,64], index: 0, kind: input, shape index: {}]
  %s1 = inlined_call_operand.vmem [shape: f32[1,64], index: 1, kind: input, shape index: {}]
  %s2 = inlined_call_operand.vmem [shape: f32[1,64], index: 2, kind: input, shape index: {}]
  %s3 = inlined_call_operand.vmem [shape: f32[64,192], index: 3, kind: input, shape index: {}]
  %s4 = inlined_call_operand.hbm [shape: f32[192,192], index: 4, kind: output, shape index: {}]
  %s5 = sld [smem:[#allocation0]]
  $region26: #{tpu_custom_call.1} parent=0
    _
  %s7 = ssub.s32 1, %s5
  %s8 = scalar_select 0, %s7, %s5
  $region1: #{tpu_custom_call.1} parent=0
    #allocation2 [shape = 'u8[196608]{0}', space=vmem, size = 0x30000, scoped, tag = 'output window, operand 0, single buffered']
    #allocation3 [shape = 's32[1]{0}', space=sflag, size = 0x4, scoped, tag = 'scoped memory for tpu_custom_call.1']
    %9 = vsyncpa [#allocation3], 0
    // Predicated region
    $region2: #{tpu_custom_call.1} parent=1 // pred_check
      _
    $region3: #{tpu_custom_call.1} parent=1 // pred_check_branch
      %11 = sbr.rel (0) target = $region5
    $region4: #{tpu_custom_call.1} parent=1 // pred_region
      _
    $region5: #{tpu_custom_call.1} parent=1 // pred_fallthru
      _
    // Predicated region
    $region6: #{tpu_custom_call.1} parent=1 // pred_check
      _
    $region7: #{tpu_custom_call.1} parent=1 // pred_check_branch
      %13 = sbr.rel (0) target = $region9
    $region8: #{tpu_custom_call.1} parent=1 // pred_region
      _
    $region9: #{tpu_custom_call.1} parent=1 // pred_fallthru
      _
    // Predicated region
    $region10: #{tpu_custom_call.1} parent=1 // pred_check
      _
    $region11: #{tpu_custom_call.1} parent=1 // pred_check_branch
      %15 = sbr.rel (0) target = $region13
    $region12: #{tpu_custom_call.1} parent=1 // pred_region
      _
    $region13: #{tpu_custom_call.1} parent=1 // pred_fallthru
      _
    // Predicated region
    $region14: #{tpu_custom_call.1} parent=1 // pred_check
      _
    $region15: #{tpu_custom_call.1} parent=1 // pred_check_branch
      %17 = sbr.rel (0) target = $region17
    $region16: #{tpu_custom_call.1} parent=1 // pred_region
      _
    $region17: #{tpu_custom_call.1} parent=1 // pred_fallthru
      _
    %v18 = vld [vmem:[%s0] sm:$0xff]
    %v19 = vld [vmem:[%s0 + $0x8] sm:$0xff]
    %v20 = vld [vmem:[%s0 + $0x10] sm:$0xff]
    %v21 = vld [vmem:[%s0 + $0x18] sm:$0xff]
    %v22 = vld [vmem:[%s0 + $0x20] sm:$0xff]
    %v23 = vld [vmem:[%s0 + $0x28] sm:$0xff]
    %v24 = vld [vmem:[%s0 + $0x30] sm:$0xff]
    %v25 = vld [vmem:[%s0 + $0x38] sm:$0xff]
    %v26 = vld [vmem:[%s0 + $0x40] sm:$0xff]
    %v27 = vld [vmem:[%s0 + $0x48] sm:$0xff]
    %v28 = vld [vmem:[%s0 + $0x50] sm:$0xff]
    %v29 = vld [vmem:[%s0 + $0x58] sm:$0xff]
    %v30 = vld [vmem:[%s0 + $0x60] sm:$0xff]
    %v31 = vld [vmem:[%s0 + $0x68] sm:$0xff]
    %v32 = vld [vmem:[%s0 + $0x70] sm:$0xff]
    %v33 = vld [vmem:[%s0 + $0x78] sm:$0xff]
    %v34 = vld [vmem:[%s0 + $0x80] sm:$0xff]
    %v35 = vld [vmem:[%s0 + $0x88] sm:$0xff]
    %v36 = vld [vmem:[%s0 + $0x90] sm:$0xff]
    %v37 = vld [vmem:[%s0 + $0x98] sm:$0xff]
    %v38 = vld [vmem:[%s0 + $0xa0] sm:$0xff]
    %v39 = vld [vmem:[%s0 + $0xa8] sm:$0xff]
    %v40 = vld [vmem:[%s0 + $0xb0] sm:$0xff]
    %v41 = vld [vmem:[%s0 + $0xb8] sm:$0xff]
    %vm42 = vcmask 523264
    %v43 = vsel %vm42, %v18, 0.0
    %44 = vadd.xlane.f32.xlu0 %v43
    %v45 = vpop.xlane.xlu0 %44
    %v46 = vsel %vm42, %v19, 0.0
    %47 = vadd.xlane.f32.xlu0 %v46
    %v48 = vpop.xlane.xlu0 %47
    %v49 = vsel %vm42, %v20, 0.0
    %50 = vadd.xlane.f32.xlu0 %v49
    %v51 = vpop.xlane.xlu0 %50
    %v52 = vsel %vm42, %v21, 0.0
    %53 = vadd.xlane.f32.xlu0 %v52
    %v54 = vpop.xlane.xlu0 %53
    %v55 = vsel %vm42, %v22, 0.0
    %56 = vadd.xlane.f32.xlu0 %v55
    %v57 = vpop.xlane.xlu0 %56
    %v58 = vsel %vm42, %v23, 0.0
    %59 = vadd.xlane.f32.xlu0 %v58
    %v60 = vpop.xlane.xlu0 %59
    %v61 = vsel %vm42, %v24, 0.0
    %62 = vadd.xlane.f32.xlu0 %v61
    %v63 = vpop.xlane.xlu0 %62
    %v64 = vsel %vm42, %v25, 0.0
    %65 = vadd.xlane.f32.xlu0 %v64
    %v66 = vpop.xlane.xlu0 %65
    %v67 = vsel %vm42, %v26, 0.0
    %68 = vadd.xlane.f32.xlu0 %v67
    %v69 = vpop.xlane.xlu0 %68
    %v70 = vsel %vm42, %v27, 0.0
    %71 = vadd.xlane.f32.xlu0 %v70
    %v72 = vpop.xlane.xlu0 %71
    %v73 = vsel %vm42, %v28, 0.0
    %74 = vadd.xlane.f32.xlu0 %v73
    %v75 = vpop.xlane.xlu0 %74
    %v76 = vsel %vm42, %v29, 0.0
    %77 = vadd.xlane.f32.xlu0 %v76
    %v78 = vpop.xlane.xlu0 %77
    %v79 = vsel %vm42, %v30, 0.0
    %80 = vadd.xlane.f32.xlu0 %v79
    %v81 = vpop.xlane.xlu0 %80
    %v82 = vsel %vm42, %v31, 0.0
    %83 = vadd.xlane.f32.xlu0 %v82
    %v84 = vpop.xlane.xlu0 %83
    %v85 = vsel %vm42, %v32, 0.0
    %86 = vadd.xlane.f32.xlu0 %v85
    %v87 = vpop.xlane.xlu0 %86
    %v88 = vsel %vm42, %v33, 0.0
    %89 = vadd.xlane.f32.xlu0 %v88
    %v90 = vpop.xlane.xlu0 %89
    %v91 = vsel %vm42, %v34, 0.0
    %92 = vadd.xlane.f32.xlu0 %v91
    %v93 = vpop.xlane.xlu0 %92
    %v94 = vsel %vm42, %v35, 0.0
    %95 = vadd.xlane.f32.xlu0 %v94
    %v96 = vpop.xlane.xlu0 %95
    %v97 = vsel %vm42, %v36, 0.0
    %98 = vadd.xlane.f32.xlu0 %v97
    %v99 = vpop.xlane.xlu0 %98
    %v100 = vsel %vm42, %v37, 0.0
    %101 = vadd.xlane.f32.xlu0 %v100
    %v102 = vpop.xlane.xlu0 %101
    %v103 = vsel %vm42, %v38, 0.0
    %104 = vadd.xlane.f32.xlu0 %v103
    %v105 = vpop.xlane.xlu0 %104
    %v106 = vsel %vm42, %v39, 0.0
    %107 = vadd.xlane.f32.xlu0 %v106
    %v108 = vpop.xlane.xlu0 %107
    %v109 = vsel %vm42, %v40, 0.0
    %110 = vadd.xlane.f32.xlu0 %v109
    %v111 = vpop.xlane.xlu0 %110
    %v112 = vsel %vm42, %v41, 0.0
    %113 = vadd.xlane.f32.xlu0 %v112
    %v114 = vpop.xlane.xlu0 %113
    %v115 = vrcp.pop 64.0
    %v116 = vmul.f32 64.0, %v115
    %v117 = vsub.f32 1.0, %v116
    %v118 = vmul.f32 %v115, %v117
    %v119 = vadd.f32 %v115, %v118
    %vm120 = vweird.f32 %v115
    %v121 = vsel %vm120, %v115, %v119
    %v122 = vmul.f32 %v45, %v121
    %v123 = vmul.f32 %v48, %v121
    %v124 = vmul.f32 %v51, %v121
    %v125 = vmul.f32 %v54, %v121
    %v126 = vmul.f32 %v57, %v121
    %v127 = vmul.f32 %v60, %v121
    %v128 = vmul.f32 %v63, %v121
    %v129 = vmul.f32 %v66, %v121
    %v130 = vmul.f32 %v69, %v121
    %v131 = vmul.f32 %v72, %v121
    %v132 = vmul.f32 %v75, %v121
    %v133 = vmul.f32 %v78, %v121
    %v134 = vmul.f32 %v81, %v121
    %v135 = vmul.f32 %v84, %v121
    %v136 = vmul.f32 %v87, %v121
    %v137 = vmul.f32 %v90, %v121
    %v138 = vmul.f32 %v93, %v121
    %v139 = vmul.f32 %v96, %v121
    %v140 = vmul.f32 %v99, %v121
    %v141 = vmul.f32 %v102, %v121
    %v142 = vmul.f32 %v105, %v121
    %v143 = vmul.f32 %v108, %v121
    %v144 = vmul.f32 %v111, %v121
    %v145 = vmul.f32 %v114, %v121
    %v146 = vsub.f32 %v18, %v122
    %v147 = vsub.f32 %v19, %v123
    %v148 = vsub.f32 %v20, %v124
    %v149 = vsub.f32 %v21, %v125
    %v150 = vsub.f32 %v22, %v126
    %v151 = vsub.f32 %v23, %v127
    %v152 = vsub.f32 %v24, %v128
    %v153 = vsub.f32 %v25, %v129
    %v154 = vsub.f32 %v26, %v130
    %v155 = vsub.f32 %v27, %v131
    %v156 = vsub.f32 %v28, %v132
    %v157 = vsub.f32 %v29, %v133
    %v158 = vsub.f32 %v30, %v134
    %v159 = vsub.f32 %v31, %v135
    %v160 = vsub.f32 %v32, %v136
    %v161 = vsub.f32 %v33, %v137
    %v162 = vsub.f32 %v34, %v138
    %v163 = vsub.f32 %v35, %v139
    %v164 = vsub.f32 %v36, %v140
    %v165 = vsub.f32 %v37, %v141
    %v166 = vsub.f32 %v38, %v142
    %v167 = vsub.f32 %v39, %v143
    %v168 = vsub.f32 %v40, %v144
    %v169 = vsub.f32 %v41, %v145
    %v170 = vmul.f32 %v146, %v146
    %v171 = vmul.f32 %v147, %v147
    %v172 = vmul.f32 %v148, %v148
    %v173 = vmul.f32 %v149, %v149
    %v174 = vmul.f32 %v150, %v150
    %v175 = vmul.f32 %v151, %v151
    %v176 = vmul.f32 %v152, %v152
    %v177 = vmul.f32 %v153, %v153
    %v178 = vmul.f32 %v154, %v154
    %v179 = vmul.f32 %v155, %v155
    %v180 = vmul.f32 %v156, %v156
    %v181 = vmul.f32 %v157, %v157
    %v182 = vmul.f32 %v158, %v158
    %v183 = vmul.f32 %v159, %v159
    %v184 = vmul.f32 %v160, %v160
    %v185 = vmul.f32 %v161, %v161
    %v186 = vmul.f32 %v162, %v162
    %v187 = vmul.f32 %v163, %v163
    %v188 = vmul.f32 %v164, %v164
    %v189 = vmul.f32 %v165, %v165
    %v190 = vmul.f32 %v166, %v166
    %v191 = vmul.f32 %v167, %v167
    %v192 = vmul.f32 %v168, %v168
    %v193 = vmul.f32 %v169, %v169
    %v194 = vsel %vm42, %v170, 0.0
    %195 = vadd.xlane.f32.xlu0 %v194
    %v196 = vpop.xlane.xlu0 %195
    %v197 = vsel %vm42, %v171, 0.0
    %198 = vadd.xlane.f32.xlu0 %v197
    %v199 = vpop.xlane.xlu0 %198
    %v200 = vsel %vm42, %v172, 0.0
    %201 = vadd.xlane.f32.xlu0 %v200
    %v202 = vpop.xlane.xlu0 %201
    %v203 = vsel %vm42, %v173, 0.0
    %204 = vadd.xlane.f32.xlu0 %v203
    %v205 = vpop.xlane.xlu0 %204
    %v206 = vsel %vm42, %v174, 0.0
    %207 = vadd.xlane.f32.xlu0 %v206
    %v208 = vpop.xlane.xlu0 %207
    %v209 = vsel %vm42, %v175, 0.0
    %210 = vadd.xlane.f32.xlu0 %v209
    %v211 = vpop.xlane.xlu0 %210
    %v212 = vsel %vm42, %v176, 0.0
    %213 = vadd.xlane.f32.xlu0 %v212
    %v214 = vpop.xlane.xlu0 %213
    %v215 = vsel %vm42, %v177, 0.0
    %216 = vadd.xlane.f32.xlu0 %v215
    %v217 = vpop.xlane.xlu0 %216
    %v218 = vsel %vm42, %v178, 0.0
    %219 = vadd.xlane.f32.xlu0 %v218
    %v220 = vpop.xlane.xlu0 %219
    %v221 = vsel %vm42, %v179, 0.0
    %222 = vadd.xlane.f32.xlu0 %v221
    %v223 = vpop.xlane.xlu0 %222
    %v224 = vsel %vm42, %v180, 0.0
    %225 = vadd.xlane.f32.xlu0 %v224
    %v226 = vpop.xlane.xlu0 %225
    %v227 = vsel %vm42, %v181, 0.0
    %228 = vadd.xlane.f32.xlu0 %v227
    %v229 = vpop.xlane.xlu0 %228
    %v230 = vsel %vm42, %v182, 0.0
    %231 = vadd.xlane.f32.xlu0 %v230
    %v232 = vpop.xlane.xlu0 %231
    %v233 = vsel %vm42, %v183, 0.0
    %234 = vadd.xlane.f32.xlu0 %v233
    %v235 = vpop.xlane.xlu0 %234
    %v236 = vsel %vm42, %v184, 0.0
    %237 = vadd.xlane.f32.xlu0 %v236
    %v238 = vpop.xlane.xlu0 %237
    %v239 = vsel %vm42, %v185, 0.0
    %240 = vadd.xlane.f32.xlu0 %v239
    %v241 = vpop.xlane.xlu0 %240
    %v242 = vsel %vm42, %v186, 0.0
    %243 = vadd.xlane.f32.xlu0 %v242
    %v244 = vpop.xlane.xlu0 %243
    %v245 = vsel %vm42, %v187, 0.0
    %246 = vadd.xlane.f32.xlu0 %v245
    %v247 = vpop.xlane.xlu0 %246
    %v248 = vsel %vm42, %v188, 0.0
    %249 = vadd.xlane.f32.xlu0 %v248
    %v250 = vpop.xlane.xlu0 %249
    %v251 = vsel %vm42, %v189, 0.0
    %252 = vadd.xlane.f32.xlu0 %v251
    %v253 = vpop.xlane.xlu0 %252
    %v254 = vsel %vm42, %v190, 0.0
    %255 = vadd.xlane.f32.xlu0 %v254
    %v256 = vpop.xlane.xlu0 %255
    %v257 = vsel %vm42, %v191, 0.0
    %258 = vadd.xlane.f32.xlu0 %v257
    %v259 = vpop.xlane.xlu0 %258
    %v260 = vsel %vm42, %v192, 0.0
    %261 = vadd.xlane.f32.xlu0 %v260
    %v262 = vpop.xlane.xlu0 %261
    %v263 = vsel %vm42, %v193, 0.0
    %264 = vadd.xlane.f32.xlu0 %v263
    %v265 = vpop.xlane.xlu0 %264
    %v266 = vmul.f32 %v196, %v121
    %v267 = vmul.f32 %v199, %v121
    %v268 = vmul.f32 %v202, %v121
    %v269 = vmul.f32 %v205, %v121
    %v270 = vmul.f32 %v208, %v121
    %v271 = vmul.f32 %v211, %v121
    %v272 = vmul.f32 %v214, %v121
    %v273 = vmul.f32 %v217, %v121
    %v274 = vmul.f32 %v220, %v121
    %v275 = vmul.f32 %v223, %v121
    %v276 = vmul.f32 %v226, %v121
    %v277 = vmul.f32 %v229, %v121
    %v278 = vmul.f32 %v232, %v121
    %v279 = vmul.f32 %v235, %v121
    %v280 = vmul.f32 %v238, %v121
    %v281 = vmul.f32 %v241, %v121
    %v282 = vmul.f32 %v244, %v121
    %v283 = vmul.f32 %v247, %v121
    %v284 = vmul.f32 %v250, %v121
    %v285 = vmul.f32 %v253, %v121
    %v286 = vmul.f32 %v256, %v121
    %v287 = vmul.f32 %v259, %v121
    %v288 = vmul.f32 %v262, %v121
    %v289 = vmul.f32 %v265, %v121
    %v290 = vadd.f32 %v266, 1e-05
    %v291 = vadd.f32 %v267, 1e-05
    %v292 = vadd.f32 %v268, 1e-05
    %v293 = vadd.f32 %v269, 1e-05
    %v294 = vadd.f32 %v270, 1e-05
    %v295 = vadd.f32 %v271, 1e-05
    %v296 = vadd.f32 %v272, 1e-05
    %v297 = vadd.f32 %v273, 1e-05
    %v298 = vadd.f32 %v274, 1e-05
    %v299 = vadd.f32 %v275, 1e-05
    %v300 = vadd.f32 %v276, 1e-05
    %v301 = vadd.f32 %v277, 1e-05
    %v302 = vadd.f32 %v278, 1e-05
    %v303 = vadd.f32 %v279, 1e-05
    %v304 = vadd.f32 %v280, 1e-05
    %v305 = vadd.f32 %v281, 1e-05
    %v306 = vadd.f32 %v282, 1e-05
    %v307 = vadd.f32 %v283, 1e-05
    %v308 = vadd.f32 %v284, 1e-05
    %v309 = vadd.f32 %v285, 1e-05
    %v310 = vadd.f32 %v286, 1e-05
    %v311 = vadd.f32 %v287, 1e-05
    %v312 = vadd.f32 %v288, 1e-05
    %v313 = vadd.f32 %v289, 1e-05
    %v314 = vrsqrt.pop %v290
    %v315 = vmul.f32 %v314, %v290
    %v316 = vmul.f32 %v315, %v314
    %v317 = vmul.f32 0.5, %v316
    %v318 = vsub.f32 1.5, %v317
    %v319 = vmul.f32 %v314, %v318
    %vm320 = vweird.f32 %v290
    %vm321 = vweird.f32 %v314
    %vm322 = vmor %vm320, %vm321
    %v323 = vsel %vm322, %v314, %v319
    %v324 = vrsqrt.pop %v291
    %v325 = vmul.f32 %v324, %v291
    %v326 = vmul.f32 %v325, %v324
    %v327 = vmul.f32 0.5, %v326
    %v328 = vsub.f32 1.5, %v327
    %v329 = vmul.f32 %v324, %v328
    %vm330 = vweird.f32 %v291
    %vm331 = vweird.f32 %v324
    %vm332 = vmor %vm330, %vm331
    %v333 = vsel %vm332, %v324, %v329
    %v334 = vrsqrt.pop %v292
    %v335 = vmul.f32 %v334, %v292
    %v336 = vmul.f32 %v335, %v334
    %v337 = vmul.f32 0.5, %v336
    %v338 = vsub.f32 1.5, %v337
    %v339 = vmul.f32 %v334, %v338
    %vm340 = vweird.f32 %v292
    %vm341 = vweird.f32 %v334
    %vm342 = vmor %vm340, %vm341
    %v343 = vsel %vm342, %v334, %v339
    %v344 = vrsqrt.pop %v293
    %v345 = vmul.f32 %v344, %v293
    %v346 = vmul.f32 %v345, %v344
    %v347 = vmul.f32 0.5, %v346
    %v348 = vsub.f32 1.5, %v347
    %v349 = vmul.f32 %v344, %v348
    %vm350 = vweird.f32 %v293
    %vm351 = vweird.f32 %v344
    %vm352 = vmor %vm350, %vm351
    %v353 = vsel %vm352, %v344, %v349
    %v354 = vrsqrt.pop %v294
    %v355 = vmul.f32 %v354, %v294
    %v356 = vmul.f32 %v355, %v354
    %v357 = vmul.f32 0.5, %v356
    %v358 = vsub.f32 1.5, %v357
    %v359 = vmul.f32 %v354, %v358
    %vm360 = vweird.f32 %v294
    %vm361 = vweird.f32 %v354
    %vm362 = vmor %vm360, %vm361
    %v363 = vsel %vm362, %v354, %v359
    %v364 = vrsqrt.pop %v295
    %v365 = vmul.f32 %v364, %v295
    %v366 = vmul.f32 %v365, %v364
    %v367 = vmul.f32 0.5, %v366
    %v368 = vsub.f32 1.5, %v367
    %v369 = vmul.f32 %v364, %v368
    %vm370 = vweird.f32 %v295
    %vm371 = vweird.f32 %v364
    %vm372 = vmor %vm370, %vm371
    %v373 = vsel %vm372, %v364, %v369
    %v374 = vrsqrt.pop %v296
    %v375 = vmul.f32 %v374, %v296
    %v376 = vmul.f32 %v375, %v374
    %v377 = vmul.f32 0.5, %v376
    %v378 = vsub.f32 1.5, %v377
    %v379 = vmul.f32 %v374, %v378
    %vm380 = vweird.f32 %v296
    %vm381 = vweird.f32 %v374
    %vm382 = vmor %vm380, %vm381
    %v383 = vsel %vm382, %v374, %v379
    %v384 = vrsqrt.pop %v297
    %v385 = vmul.f32 %v384, %v297
    %v386 = vmul.f32 %v385, %v384
    %v387 = vmul.f32 0.5, %v386
    %v388 = vsub.f32 1.5, %v387
    %v389 = vmul.f32 %v384, %v388
    %vm390 = vweird.f32 %v297
    %vm391 = vweird.f32 %v384
    %vm392 = vmor %vm390, %vm391
    %v393 = vsel %vm392, %v384, %v389
    %v394 = vrsqrt.pop %v298
    %v395 = vmul.f32 %v394, %v298
    %v396 = vmul.f32 %v395, %v394
    %v397 = vmul.f32 0.5, %v396
    %v398 = vsub.f32 1.5, %v397
    %v399 = vmul.f32 %v394, %v398
    %vm400 = vweird.f32 %v298
    %vm401 = vweird.f32 %v394
    %vm402 = vmor %vm400, %vm401
    %v403 = vsel %vm402, %v394, %v399
    %v404 = vrsqrt.pop %v299
    %v405 = vmul.f32 %v404, %v299
    %v406 = vmul.f32 %v405, %v404
    %v407 = vmul.f32 0.5, %v406
    %v408 = vsub.f32 1.5, %v407
    %v409 = vmul.f32 %v404, %v408
    %vm410 = vweird.f32 %v299
    %vm411 = vweird.f32 %v404
    %vm412 = vmor %vm410, %vm411
    %v413 = vsel %vm412, %v404, %v409
    %v414 = vrsqrt.pop %v300
    %v415 = vmul.f32 %v414, %v300
    %v416 = vmul.f32 %v415, %v414
    %v417 = vmul.f32 0.5, %v416
    %v418 = vsub.f32 1.5, %v417
    %v419 = vmul.f32 %v414, %v418
    %vm420 = vweird.f32 %v300
    %vm421 = vweird.f32 %v414
    %vm422 = vmor %vm420, %vm421
    %v423 = vsel %vm422, %v414, %v419
    %v424 = vrsqrt.pop %v301
    %v425 = vmul.f32 %v424, %v301
    %v426 = vmul.f32 %v425, %v424
    %v427 = vmul.f32 0.5, %v426
    %v428 = vsub.f32 1.5, %v427
    %v429 = vmul.f32 %v424, %v428
    %vm430 = vweird.f32 %v301
    %vm431 = vweird.f32 %v424
    %vm432 = vmor %vm430, %vm431
    %v433 = vsel %vm432, %v424, %v429
    %v434 = vrsqrt.pop %v302
    %v435 = vmul.f32 %v434, %v302
    %v436 = vmul.f32 %v435, %v434
    %v437 = vmul.f32 0.5, %v436
    %v438 = vsub.f32 1.5, %v437
    %v439 = vmul.f32 %v434, %v438
    %vm440 = vweird.f32 %v302
    %vm441 = vweird.f32 %v434
    %vm442 = vmor %vm440, %vm441
    %v443 = vsel %vm442, %v434, %v439
    %v444 = vrsqrt.pop %v303
    %v445 = vmul.f32 %v444, %v303
    %v446 = vmul.f32 %v445, %v444
    %v447 = vmul.f32 0.5, %v446
    %v448 = vsub.f32 1.5, %v447
    %v449 = vmul.f32 %v444, %v448
    %vm450 = vweird.f32 %v303
    %vm451 = vweird.f32 %v444
    %vm452 = vmor %vm450, %vm451
    %v453 = vsel %vm452, %v444, %v449
    %v454 = vrsqrt.pop %v304
    %v455 = vmul.f32 %v454, %v304
    %v456 = vmul.f32 %v455, %v454
    %v457 = vmul.f32 0.5, %v456
    %v458 = vsub.f32 1.5, %v457
    %v459 = vmul.f32 %v454, %v458
    %vm460 = vweird.f32 %v304
    %vm461 = vweird.f32 %v454
    %vm462 = vmor %vm460, %vm461
    %v463 = vsel %vm462, %v454, %v459
    %v464 = vrsqrt.pop %v305
    %v465 = vmul.f32 %v464, %v305
    %v466 = vmul.f32 %v465, %v464
    %v467 = vmul.f32 0.5, %v466
    %v468 = vsub.f32 1.5, %v467
    %v469 = vmul.f32 %v464, %v468
    %vm470 = vweird.f32 %v305
    %vm471 = vweird.f32 %v464
    %vm472 = vmor %vm470, %vm471
    %v473 = vsel %vm472, %v464, %v469
    %v474 = vrsqrt.pop %v306
    %v475 = vmul.f32 %v474, %v306
    %v476 = vmul.f32 %v475, %v474
    %v477 = vmul.f32 0.5, %v476
    %v478 = vsub.f32 1.5, %v477
    %v479 = vmul.f32 %v474, %v478
    %vm480 = vweird.f32 %v306
    %vm481 = vweird.f32 %v474
    %vm482 = vmor %vm480, %vm481
    %v483 = vsel %vm482, %v474, %v479
    %v484 = vrsqrt.pop %v307
    %v485 = vmul.f32 %v484, %v307
    %v486 = vmul.f32 %v485, %v484
    %v487 = vmul.f32 0.5, %v486
    %v488 = vsub.f32 1.5, %v487
    %v489 = vmul.f32 %v484, %v488
    %vm490 = vweird.f32 %v307
    %vm491 = vweird.f32 %v484
    %vm492 = vmor %vm490, %vm491
    %v493 = vsel %vm492, %v484, %v489
    %v494 = vrsqrt.pop %v308
    %v495 = vmul.f32 %v494, %v308
    %v496 = vmul.f32 %v495, %v494
    %v497 = vmul.f32 0.5, %v496
    %v498 = vsub.f32 1.5, %v497
    %v499 = vmul.f32 %v494, %v498
    %vm500 = vweird.f32 %v308
    %vm501 = vweird.f32 %v494
    %vm502 = vmor %vm500, %vm501
    %v503 = vsel %vm502, %v494, %v499
    %v504 = vrsqrt.pop %v309
    %v505 = vmul.f32 %v504, %v309
    %v506 = vmul.f32 %v505, %v504
    %v507 = vmul.f32 0.5, %v506
    %v508 = vsub.f32 1.5, %v507
    %v509 = vmul.f32 %v504, %v508
    %vm510 = vweird.f32 %v309
    %vm511 = vweird.f32 %v504
    %vm512 = vmor %vm510, %vm511
    %v513 = vsel %vm512, %v504, %v509
    %v514 = vrsqrt.pop %v310
    %v515 = vmul.f32 %v514, %v310
    %v516 = vmul.f32 %v515, %v514
    %v517 = vmul.f32 0.5, %v516
    %v518 = vsub.f32 1.5, %v517
    %v519 = vmul.f32 %v514, %v518
    %vm520 = vweird.f32 %v310
    %vm521 = vweird.f32 %v514
    %vm522 = vmor %vm520, %vm521
    %v523 = vsel %vm522, %v514, %v519
    %v524 = vrsqrt.pop %v311
    %v525 = vmul.f32 %v524, %v311
    %v526 = vmul.f32 %v525, %v524
    %v527 = vmul.f32 0.5, %v526
    %v528 = vsub.f32 1.5, %v527
    %v529 = vmul.f32 %v524, %v528
    %vm530 = vweird.f32 %v311
    %vm531 = vweird.f32 %v524
    %vm532 = vmor %vm530, %vm531
    %v533 = vsel %vm532, %v524, %v529
    %v534 = vrsqrt.pop %v312
    %v535 = vmul.f32 %v534, %v312
    %v536 = vmul.f32 %v535, %v534
    %v537 = vmul.f32 0.5, %v536
    %v538 = vsub.f32 1.5, %v537
    %v539 = vmul.f32 %v534, %v538
    %vm540 = vweird.f32 %v312
    %vm541 = vweird.f32 %v534
    %vm542 = vmor %vm540, %vm541
    %v543 = vsel %vm542, %v534, %v539
    %v544 = vrsqrt.pop %v313
    %v545 = vmul.f32 %v544, %v313
    %v546 = vmul.f32 %v545, %v544
    %v547 = vmul.f32 0.5, %v546
    %v548 = vsub.f32 1.5, %v547
    %v549 = vmul.f32 %v544, %v548
    %vm550 = vweird.f32 %v313
    %vm551 = vweird.f32 %v544
    %vm552 = vmor %vm550, %vm551
    %v553 = vsel %vm552, %v544, %v549
    %v554 = vmul.f32 %v146, %v323
    %v555 = vmul.f32 %v147, %v333
    %v556 = vmul.f32 %v148, %v343
    %v557 = vmul.f32 %v149, %v353
    %v558 = vmul.f32 %v150, %v363
    %v559 = vmul.f32 %v151, %v373
    %v560 = vmul.f32 %v152, %v383
    %v561 = vmul.f32 %v153, %v393
    %v562 = vmul.f32 %v154, %v403
    %v563 = vmul.f32 %v155, %v413
    %v564 = vmul.f32 %v156, %v423
    %v565 = vmul.f32 %v157, %v433
    %v566 = vmul.f32 %v158, %v443
    %v567 = vmul.f32 %v159, %v453
    %v568 = vmul.f32 %v160, %v463
    %v569 = vmul.f32 %v161, %v473
    %v570 = vmul.f32 %v162, %v483
    %v571 = vmul.f32 %v163, %v493
    %v572 = vmul.f32 %v164, %v503
    %v573 = vmul.f32 %v165, %v513
    %v574 = vmul.f32 %v166, %v523
    %v575 = vmul.f32 %v167, %v533
    %v576 = vmul.f32 %v168, %v543
    %v577 = vmul.f32 %v169, %v553
    %v578 = vld [vmem:[%s1] sm:$0x1]
    %v580 = vperm.slane %v578, 0
    %v582 = vmul.f32 %v554, %v580
    %v583 = vmul.f32 %v555, %v580
    %v584 = vmul.f32 %v556, %v580
    %v585 = vmul.f32 %v557, %v580
    %v586 = vmul.f32 %v558, %v580
    %v587 = vmul.f32 %v559, %v580
    %v588 = vmul.f32 %v560, %v580
    %v589 = vmul.f32 %v561, %v580
    %v590 = vmul.f32 %v562, %v580
    %v591 = vmul.f32 %v563, %v580
    %v592 = vmul.f32 %v564, %v580
    %v593 = vmul.f32 %v565, %v580
    %v594 = vmul.f32 %v566, %v580
    %v595 = vmul.f32 %v567, %v580
    %v596 = vmul.f32 %v568, %v580
    %v597 = vmul.f32 %v569, %v580
    %v598 = vmul.f32 %v570, %v580
    %v599 = vmul.f32 %v571, %v580
    %v600 = vmul.f32 %v572, %v580
    %v601 = vmul.f32 %v573, %v580
    %v602 = vmul.f32 %v574, %v580
    %v603 = vmul.f32 %v575, %v580
    %v604 = vmul.f32 %v576, %v580
    %v605 = vmul.f32 %v577, %v580
    %v606 = vld [vmem:[%s2] sm:$0x1]
    %v608 = vperm.slane %v606, 0
    %v610 = vadd.f32 %v582, %v608
    %v611 = vadd.f32 %v583, %v608
    %v612 = vadd.f32 %v584, %v608
    %v613 = vadd.f32 %v585, %v608
    %v614 = vadd.f32 %v586, %v608
    %v615 = vadd.f32 %v587, %v608
    %v616 = vadd.f32 %v588, %v608
    %v617 = vadd.f32 %v589, %v608
    %v618 = vadd.f32 %v590, %v608
    %v619 = vadd.f32 %v591, %v608
    %v620 = vadd.f32 %v592, %v608
    %v621 = vadd.f32 %v593, %v608
    %v622 = vadd.f32 %v594, %v608
    %v623 = vadd.f32 %v595, %v608
    %v624 = vadd.f32 %v596, %v608
    %v625 = vadd.f32 %v597, %v608
    %v626 = vadd.f32 %v598, %v608
    %v627 = vadd.f32 %v599, %v608
    %v628 = vadd.f32 %v600, %v608
    %v629 = vadd.f32 %v601, %v608
    %v630 = vadd.f32 %v602, %v608
    %v631 = vadd.f32 %v603, %v608
    %v632 = vadd.f32 %v604, %v608
    %v633 = vadd.f32 %v605, %v608
    %v634 = vld [vmem:[%s3] sm:$0xff]
    %v635 = vld [vmem:[%s3 + $0x8] sm:$0xff]
    %v636 = vld [vmem:[%s3 + $0x10] sm:$0xff]
    %v637 = vld [vmem:[%s3 + $0x18] sm:$0xff]
    %v638 = vld [vmem:[%s3 + $0x20] sm:$0xff]
    %v639 = vld [vmem:[%s3 + $0x28] sm:$0xff]
    %v640 = vld [vmem:[%s3 + $0x30] sm:$0xff]
    %v641 = vld [vmem:[%s3 + $0x38] sm:$0xff]
    %v642 = vld [vmem:[%s3 + $0x40] sm:$0xff]
    %v643 = vld [vmem:[%s3 + $0x48] sm:$0xff]
    %v644 = vld [vmem:[%s3 + $0x50] sm:$0xff]
    %v645 = vld [vmem:[%s3 + $0x58] sm:$0xff]
    %v646 = vld [vmem:[%s3 + $0x60] sm:$0xff]
    %v647 = vld [vmem:[%s3 + $0x68] sm:$0xff]
    %v648 = vld [vmem:[%s3 + $0x70] sm:$0xff]
    %v649 = vld [vmem:[%s3 + $0x78] sm:$0xff]
    %v651 = vsel %vm42, %v610, 0
    %v654 = vsel %vm42, %v611, 0
    %v657 = vsel %vm42, %v612, 0
    %v660 = vsel %vm42, %v613, 0
    %v663 = vsel %vm42, %v614, 0
    %v666 = vsel %vm42, %v615, 0
    %v669 = vsel %vm42, %v616, 0
    %v672 = vsel %vm42, %v617, 0
    %v675 = vsel %vm42, %v618, 0
    %v678 = vsel %vm42, %v619, 0
    %v681 = vsel %vm42, %v620, 0
    %v684 = vsel %vm42, %v621, 0
    %v687 = vsel %vm42, %v622, 0
    %v690 = vsel %vm42, %v623, 0
    %v693 = vsel %vm42, %v624, 0
    %v696 = vsel %vm42, %v625, 0
    %v699 = vsel %vm42, %v626, 0
    %v702 = vsel %vm42, %v627, 0
    %v705 = vsel %vm42, %v628, 0
    %v708 = vsel %vm42, %v629, 0
    %v711 = vsel %vm42, %v630, 0
    %v714 = vsel %vm42, %v631, 0
    %v717 = vsel %vm42, %v632, 0
    %v720 = vsel %vm42, %v633, 0
    %722 = vmatpush.msra.mxu0 0.0
    %723 = vmatpush.msra.mxu0 0.0
    %724 = vmatpush.msra.mxu0 0.0
    %725 = vmatpush.msra.mxu0 0.0
    %726 = vmatpush.msra.mxu0 0.0
    %727 = vmatpush.msra.mxu0 0.0
    %728 = vmatpush.msra.mxu0 0.0
    %729 = vmatpush.msra.mxu0 0.0
    %730 = vmatpush.msra.mxu0 %v648
    %731 = vmatpush.msra.mxu0 %v646
    %732 = vmatpush.msra.mxu0 %v644
    %733 = vmatpush.msra.mxu0 %v642
    %734 = vmatpush.msra.mxu0 %v640
    %735 = vmatpush.msra.mxu0 %v638
    %736 = vmatpush.msra.mxu0 %v636
    %737 = vmatpush.msra.mxu0 %v634
    %738 = vmatmul.f32.gmra.mxu0 %v651
    %v739 = vpop.f32.mrf.mxu0
    %v740 = vadd.f32 0.0, %v739
    %741 = vmatmul.f32.gmra.mxu0 %v654
    %v742 = vpop.f32.mrf.mxu0
    %v743 = vadd.f32 0.0, %v742
    %744 = vmatmul.f32.gmra.mxu0 %v657
    %v745 = vpop.f32.mrf.mxu0
    %v746 = vadd.f32 0.0, %v745
    %747 = vmatmul.f32.gmra.mxu0 %v660
    %v748 = vpop.f32.mrf.mxu0
    %v749 = vadd.f32 0.0, %v748
    %750 = vmatmul.f32.gmra.mxu0 %v663
    %v751 = vpop.f32.mrf.mxu0
    %v752 = vadd.f32 0.0, %v751
    %753 = vmatmul.f32.gmra.mxu0 %v666
    %v754 = vpop.f32.mrf.mxu0
    %v755 = vadd.f32 0.0, %v754
    %756 = vmatmul.f32.gmra.mxu0 %v669
    %v757 = vpop.f32.mrf.mxu0
    %v758 = vadd.f32 0.0, %v757
    %759 = vmatmul.f32.gmra.mxu0 %v672
    %v760 = vpop.f32.mrf.mxu0
    %v761 = vadd.f32 0.0, %v760
    %762 = vmatmul.f32.gmra.mxu0 %v675
    %v763 = vpop.f32.mrf.mxu0
    %v764 = vadd.f32 0.0, %v763
    %765 = vmatmul.f32.gmra.mxu0 %v678
    %v766 = vpop.f32.mrf.mxu0
    %v767 = vadd.f32 0.0, %v766
    %768 = vmatmul.f32.gmra.mxu0 %v681
    %v769 = vpop.f32.mrf.mxu0
    %v770 = vadd.f32 0.0, %v769
    %771 = vmatmul.f32.gmra.mxu0 %v684
    %v772 = vpop.f32.mrf.mxu0
    %v773 = vadd.f32 0.0, %v772
    %774 = vmatmul.f32.gmra.mxu0 %v687
    %v775 = vpop.f32.mrf.mxu0
    %v776 = vadd.f32 0.0, %v775
    %777 = vmatmul.f32.gmra.mxu0 %v690
    %v778 = vpop.f32.mrf.mxu0
    %v779 = vadd.f32 0.0, %v778
    %780 = vmatmul.f32.gmra.mxu0 %v693
    %v781 = vpop.f32.mrf.mxu0
    %v782 = vadd.f32 0.0, %v781
    %783 = vmatmul.f32.gmra.mxu0 %v696
    %v784 = vpop.f32.mrf.mxu0
    %v785 = vadd.f32 0.0, %v784
    %786 = vmatmul.f32.gmra.mxu0 %v699
    %v787 = vpop.f32.mrf.mxu0
    %v788 = vadd.f32 0.0, %v787
    %789 = vmatmul.f32.gmra.mxu0 %v702
    %v790 = vpop.f32.mrf.mxu0
    %v791 = vadd.f32 0.0, %v790
    %792 = vmatmul.f32.gmra.mxu0 %v705
    %v793 = vpop.f32.mrf.mxu0
    %v794 = vadd.f32 0.0, %v793
    %795 = vmatmul.f32.gmra.mxu0 %v708
    %v796 = vpop.f32.mrf.mxu0
    %v797 = vadd.f32 0.0, %v796
    %798 = vmatmul.f32.gmra.mxu0 %v711
    %v799 = vpop.f32.mrf.mxu0
    %v800 = vadd.f32 0.0, %v799
    %801 = vmatmul.f32.gmra.mxu0 %v714
    %v802 = vpop.f32.mrf.mxu0
    %v803 = vadd.f32 0.0, %v802
    %804 = vmatmul.f32.gmra.mxu0 %v717
    %v805 = vpop.f32.mrf.mxu0
    %v806 = vadd.f32 0.0, %v805
    %807 = vmatmul.f32.gmra.mxu0 %v720
    %v808 = vpop.f32.mrf.mxu0
    %v809 = vadd.f32 0.0, %v808
    %810 = vdwg.mxu0
    %811 = vmatpush.msra.mxu0 0.0
    %812 = vmatpush.msra.mxu0 0.0
    %813 = vmatpush.msra.mxu0 0.0
    %814 = vmatpush.msra.mxu0 0.0
    %815 = vmatpush.msra.mxu0 0.0
    %816 = vmatpush.msra.mxu0 0.0
    %817 = vmatpush.msra.mxu0 0.0
    %818 = vmatpush.msra.mxu0 0.0
    %819 = vmatpush.msra.mxu0 %v649
    %820 = vmatpush.msra.mxu0 %v647
    %821 = vmatpush.msra.mxu0 %v645
    %822 = vmatpush.msra.mxu0 %v643
    %823 = vmatpush.msra.mxu0 %v641
    %824 = vmatpush.msra.mxu0 %v639
    %825 = vmatpush.msra.mxu0 %v637
    %826 = vmatpush.msra.mxu0 %v635
    %827 = vmatmul.f32.gmra.mxu0 %v651
    %v828 = vpop.f32.mrf.mxu0
    %v829 = vadd.f32 0.0, %v828
    %830 = vmatmul.f32.gmra.mxu0 %v654
    %v831 = vpop.f32.mrf.mxu0
    %v832 = vadd.f32 0.0, %v831
    %833 = vmatmul.f32.gmra.mxu0 %v657
    %v834 = vpop.f32.mrf.mxu0
    %v835 = vadd.f32 0.0, %v834
    %836 = vmatmul.f32.gmra.mxu0 %v660
    %v837 = vpop.f32.mrf.mxu0
    %v838 = vadd.f32 0.0, %v837
    %839 = vmatmul.f32.gmra.mxu0 %v663
    %v840 = vpop.f32.mrf.mxu0
    %v841 = vadd.f32 0.0, %v840
    %842 = vmatmul.f32.gmra.mxu0 %v666
    %v843 = vpop.f32.mrf.mxu0
    %v844 = vadd.f32 0.0, %v843
    %845 = vmatmul.f32.gmra.mxu0 %v669
    %v846 = vpop.f32.mrf.mxu0
    %v847 = vadd.f32 0.0, %v846
    %848 = vmatmul.f32.gmra.mxu0 %v672
    %v849 = vpop.f32.mrf.mxu0
    %v850 = vadd.f32 0.0, %v849
    %851 = vmatmul.f32.gmra.mxu0 %v675
    %v852 = vpop.f32.mrf.mxu0
    %v853 = vadd.f32 0.0, %v852
    %854 = vmatmul.f32.gmra.mxu0 %v678
    %v855 = vpop.f32.mrf.mxu0
    %v856 = vadd.f32 0.0, %v855
    %857 = vmatmul.f32.gmra.mxu0 %v681
    %v858 = vpop.f32.mrf.mxu0
    %v859 = vadd.f32 0.0, %v858
    %860 = vmatmul.f32.gmra.mxu0 %v684
    %v861 = vpop.f32.mrf.mxu0
    %v862 = vadd.f32 0.0, %v861
    %863 = vmatmul.f32.gmra.mxu0 %v687
    %v864 = vpop.f32.mrf.mxu0
    %v865 = vadd.f32 0.0, %v864
    %866 = vmatmul.f32.gmra.mxu0 %v690
    %v867 = vpop.f32.mrf.mxu0
    %v868 = vadd.f32 0.0, %v867
    %869 = vmatmul.f32.gmra.mxu0 %v693
    %v870 = vpop.f32.mrf.mxu0
    %v871 = vadd.f32 0.0, %v870
    %872 = vmatmul.f32.gmra.mxu0 %v696
    %v873 = vpop.f32.mrf.mxu0
    %v874 = vadd.f32 0.0, %v873
    %875 = vmatmul.f32.gmra.mxu0 %v699
    %v876 = vpop.f32.mrf.mxu0
    %v877 = vadd.f32 0.0, %v876
    %878 = vmatmul.f32.gmra.mxu0 %v702
    %v879 = vpop.f32.mrf.mxu0
    %v880 = vadd.f32 0.0, %v879
    %881 = vmatmul.f32.gmra.mxu0 %v705
    %v882 = vpop.f32.mrf.mxu0
    %v883 = vadd.f32 0.0, %v882
    %884 = vmatmul.f32.gmra.mxu0 %v708
    %v885 = vpop.f32.mrf.mxu0
    %v886 = vadd.f32 0.0, %v885
    %887 = vmatmul.f32.gmra.mxu0 %v711
    %v888 = vpop.f32.mrf.mxu0
    %v889 = vadd.f32 0.0, %v888
    %890 = vmatmul.f32.gmra.mxu0 %v714
    %v891 = vpop.f32.mrf.mxu0
    %v892 = vadd.f32 0.0, %v891
    %893 = vmatmul.f32.gmra.mxu0 %v717
    %v894 = vpop.f32.mrf.mxu0
    %v895 = vadd.f32 0.0, %v894
    %896 = vmatmul.f32.gmra.mxu0 %v720
    %v897 = vpop.f32.mrf.mxu0
    %v898 = vadd.f32 0.0, %v897
    %899 = vdwg.mxu0
    %900 = vst [vmem:[#allocation2] sm:$0xff] %v740
    %901 = vst.msk [vmem:[#allocation2 + $0x8] sm:$0xff] %vm42, %v829
    %902 = vst [vmem:[#allocation2 + $0x10] sm:$0xff] %v743
    %903 = vst.msk [vmem:[#allocation2 + $0x18] sm:$0xff] %vm42, %v832
    %904 = vst [vmem:[#allocation2 + $0x20] sm:$0xff] %v746
    %905 = vst.msk [vmem:[#allocation2 + $0x28] sm:$0xff] %vm42, %v835
    %906 = vst [vmem:[#allocation2 + $0x30] sm:$0xff] %v749
    %907 = vst.msk [vmem:[#allocation2 + $0x38] sm:$0xff] %vm42, %v838
    %908 = vst [vmem:[#allocation2 + $0x40] sm:$0xff] %v752
    %909 = vst.msk [vmem:[#allocation2 + $0x48] sm:$0xff] %vm42, %v841
    %910 = vst [vmem:[#allocation2 + $0x50] sm:$0xff] %v755
    %911 = vst.msk [vmem:[#allocation2 + $0x58] sm:$0xff] %vm42, %v844
    %912 = vst [vmem:[#allocation2 + $0x60] sm:$0xff] %v758
    %913 = vst.msk [vmem:[#allocation2 + $0x68] sm:$0xff] %vm42, %v847
    %914 = vst [vmem:[#allocation2 + $0x70] sm:$0xff] %v761
    %915 = vst.msk [vmem:[#allocation2 + $0x78] sm:$0xff] %vm42, %v850
    %916 = vst [vmem:[#allocation2 + $0x80] sm:$0xff] %v764
    %917 = vst.msk [vmem:[#allocation2 + $0x88] sm:$0xff] %vm42, %v853
    %918 = vst [vmem:[#allocation2 + $0x90] sm:$0xff] %v767
    %919 = vst.msk [vmem:[#allocation2 + $0x98] sm:$0xff] %vm42, %v856
    %920 = vst [vmem:[#allocation2 + $0xa0] sm:$0xff] %v770
    %921 = vst.msk [vmem:[#allocation2 + $0xa8] sm:$0xff] %vm42, %v859
    %922 = vst [vmem:[#allocation2 + $0xb0] sm:$0xff] %v773
    %923 = vst.msk [vmem:[#allocation2 + $0xb8] sm:$0xff] %vm42, %v862
    %924 = vst [vmem:[#allocation2 + $0xc0] sm:$0xff] %v776
    %925 = vst.msk [vmem:[#allocation2 + $0xc8] sm:$0xff] %vm42, %v865
    %926 = vst [vmem:[#allocation2 + $0xd0] sm:$0xff] %v779
    %927 = vst.msk [vmem:[#allocation2 + $0xd8] sm:$0xff] %vm42, %v868
    %928 = vst [vmem:[#allocation2 + $0xe0] sm:$0xff] %v782
    %929 = vst.msk [vmem:[#allocation2 + $0xe8] sm:$0xff] %vm42, %v871
    %930 = vst [vmem:[#allocation2 + $0xf0] sm:$0xff] %v785
    %931 = vst.msk [vmem:[#allocation2 + $0xf8] sm:$0xff] %vm42, %v874
    %932 = vst [vmem:[#allocation2 + $0x100] sm:$0xff] %v788
    %933 = vst.msk [vmem:[#allocation2 + $0x108] sm:$0xff] %vm42, %v877
    %934 = vst [vmem:[#allocation2 + $0x110] sm:$0xff] %v791
    %935 = vst.msk [vmem:[#allocation2 + $0x118] sm:$0xff] %vm42, %v880
    %936 = vst [vmem:[#allocation2 + $0x120] sm:$0xff] %v794
    %937 = vst.msk [vmem:[#allocation2 + $0x128] sm:$0xff] %vm42, %v883
    %938 = vst [vmem:[#allocation2 + $0x130] sm:$0xff] %v797
    %939 = vst.msk [vmem:[#allocation2 + $0x138] sm:$0xff] %vm42, %v886
    %940 = vst [vmem:[#allocation2 + $0x140] sm:$0xff] %v800
    %941 = vst.msk [vmem:[#allocation2 + $0x148] sm:$0xff] %vm42, %v889
    %942 = vst [vmem:[#allocation2 + $0x150] sm:$0xff] %v803
    %943 = vst.msk [vmem:[#allocation2 + $0x158] sm:$0xff] %vm42, %v892
    %944 = vst [vmem:[#allocation2 + $0x160] sm:$0xff] %v806
    %945 = vst.msk [vmem:[#allocation2 + $0x168] sm:$0xff] %vm42, %v895
    %946 = vst [vmem:[#allocation2 + $0x170] sm:$0xff] %v809
    %947 = vst.msk [vmem:[#allocation2 + $0x178] sm:$0xff] %vm42, %v898
    // Predicated region
    $region18: #{tpu_custom_call.1} parent=1 // pred_check
      _
    $region19: #{tpu_custom_call.1} parent=1 // pred_check_branch
      %949 = sbr.rel (0) target = $region21
    $region20: #{tpu_custom_call.1} parent=1 // pred_region
      %951 = vsyncadd [#allocation3], 0
      %s952 = sshll.u32 [#allocation2], 4
      %s953 = int_to_ptr.vmem [resolvable:$true] %s952
      %s954 = sshll.u32 %s4, 4
      %s955 = int_to_ptr.hbm [resolvable:$true] %s954
      %960 = dma.vmem_to_hbm [thread:$0]  %s953, 6144, %s955, [#allocation3], 256, 256, 16
    $region21: #{tpu_custom_call.1} parent=1 // pred_fallthru
      _
    // Predicated region
    $region22: #{tpu_custom_call.1} parent=1 // pred_check
      _
    $region23: #{tpu_custom_call.1} parent=1 // pred_check_branch
      %962 = sbr.rel (0) target = $region25
    $region24: #{tpu_custom_call.1} parent=1 // pred_region
      %964 = dma.done [#allocation3], 6144
    $region25: #{tpu_custom_call.1} parent=1 // pred_fallthru
      _
    %965 = vsyncpa [#allocation3], 1

</llo_original>
